<compile_context>
chip_gen: v7x
topology: tpu7x:2x2x1
jax: 0.10.0
libtpu: 0.0.40
codegen_flags: <defaults>
</compile_context>

<pallas_src>
import jax
import jax.numpy as jnp
from jax.experimental import pallas as pl
from jax.experimental.pallas import tpu as pltpu

EMB_DIM = 512


def _pick_tile(dim, max_tile, align=128):
    """Largest multiple of `align` that divides `dim` and is <= max_tile,
    falling back to the full dimension (single step) if none exists."""
    best = None
    t = align
    while t <= min(dim, max_tile):
        if dim % t == 0:
            best = t
        t += align
    return best if best is not None else dim


# --------------------- weight preparation (offline fold) -------------------- #
def prepare_arcface_params(weight_nhwc, C, H, W):
    """weight_nhwc: (H*W*C, EMB_DIM) f32 weight acting on preprocessed,
    NHWC-flattened pixels.  Returns (w_bf16, bias):
      * w_bf16: rows permuted to NCHW-flat order and pre-scaled by 1/127.5,
        cast to bf16 (halves streamed HBM bytes; native MXU input dtype).
      * bias:   (1, EMB_DIM) f32 column sums of the original weight (the
        folded "-127.5/127.5" term), subtracted once at the end.
    """
    d_in = H * W * C
    assert weight_nhwc.shape == (d_in, EMB_DIM)
    c = jnp.arange(C)[:, None, None]
    h = jnp.arange(H)[None, :, None]
    w = jnp.arange(W)[None, None, :]
    # perm[c*H*W + h*W + w] = NHWC flat index of the same (h, w, c) element.
    perm = ((h * W + w) * C + c).reshape(-1)
    w_perm = weight_nhwc[perm]                              # NCHW-flat row order
    w_bf16 = (w_perm * (1.0 / 127.5)).astype(jnp.bfloat16)
    bias = jnp.sum(weight_nhwc, axis=0, keepdims=True)      # (1, EMB_DIM) f32
    return w_bf16, bias


# ------------------------------ forward kernel ------------------------------ #
def _arcface_fwd_kernel(x_ref, w_ref, b_ref, o_ref, acc_ref):
    k = pl.program_id(1)

    @pl.when(k == 0)
    def _():
        acc_ref[...] = jnp.zeros_like(acc_ref)

    acc_ref[...] += jnp.dot(x_ref[...], w_ref[...],
                            preferred_element_type=jnp.float32)

    @pl.when(k == pl.num_programs(1) - 1)
    def _():
        o_ref[...] = acc_ref[...] - b_ref[...]


def arcface_forward(images_nchw, w_bf16, bias, *, tn_max=256, max_tk=2048):
    """images_nchw: (B, C, H, W) f32 pixels in [0, 255].
    w_bf16: (C*H*W, EMB_DIM) bf16 folded weight; bias: (1, EMB_DIM) f32."""
    B = images_nchw.shape[0]
    d_in = w_bf16.shape[0]
    assert images_nchw.size == B * d_in

    # No transpose: the NCHW permutation is already folded into the weight rows.
    x = images_nchw.reshape(B, d_in).astype(jnp.bfloat16)

    tn = _pick_tile(EMB_DIM, tn_max)     # 256: lane-dense, full MXU width v6e/v7x
    tk = _pick_tile(d_in, max_tk)        # keep per-step weight tile a few MiB
    grid = (EMB_DIM // tn, d_in // tk)   # (N parallel, K arbitrary/last)

    cost = pl.CostEstimate(
        flops=2 * B * d_in * EMB_DIM,
        transcendentals=0,
        bytes_accessed=(x.size * x.dtype.itemsize
                        + w_bf16.size * w_bf16.dtype.itemsize
                        + bias.size * bias.dtype.itemsize
                        + B * EMB_DIM * 4),
    )

    return pl.pallas_call(
        _arcface_fwd_kernel,
        out_shape=jax.ShapeDtypeStruct((B, EMB_DIM), jnp.float32),
        grid_spec=pltpu.PrefetchScalarGridSpec(
            num_scalar_prefetch=0,
            grid=grid,
            in_specs=[
                pl.BlockSpec((B, tk), lambda j, k: (0, k)),    # activations
                pl.BlockSpec((tk, tn), lambda j, k: (k, j)),   # weight tile
                pl.BlockSpec((1, tn), lambda j, k: (0, j)),    # folded bias
            ],
            out_specs=pl.BlockSpec((B, tn), lambda j, k: (0, j)),
            scratch_shapes=[pltpu.VMEM((B, tn), jnp.float32)],
        ),
        compiler_params=pltpu.CompilerParams(
            dimension_semantics=("parallel", "arbitrary")),
        cost_estimate=cost,
    )(x, w_bf16, bias)


# ----------------------------- similarity kernel ---------------------------- #
def _similarity_kernel(ei_ref, ej_ref, o_ref):
    ei = ei_ref[...]
    ej = ej_ref[...]
    # Contract on the feature dim directly (no in-kernel transpose / XLU work).
    dots = jax.lax.dot_general(
        ei, ej, dimension_numbers=(((1,), (1,)), ((), ())),
        preferred_element_type=jnp.float32)
    # Matches the module: np.linalg.norm on the whole matrix = Frobenius norm.
    norm_i = jnp.sqrt(jnp.sum(ei * ei))
    norm_j = jnp.sqrt(jnp.sum(ej * ej))
    o_ref[...] = dots * pl.reciprocal(norm_i * norm_j, approx=False) * 100.0


def compute_similarities(e_i, e_j):
    # TODO(synk): for production-sized Bi/Bj this should be tiled over
    # (Bi//128, Bj//128) with norms computed in a separate pass; single block
    # is correct and cheapest at the toy sizes used here.
    Bi, D = e_i.shape
    Bj, _ = e_j.shape
    cost = pl.CostEstimate(
        flops=2 * Bi * Bj * D + 2 * (Bi + Bj) * D,
        transcendentals=2,
        bytes_accessed=(Bi * D + Bj * D + Bi * Bj) * 4,
    )
    return pl.pallas_call(
        _similarity_kernel,
        out_shape=jax.ShapeDtypeStruct((Bi, Bj), jnp.float32),
        in_specs=[
            pl.BlockSpec((Bi, D), lambda: (0, 0)),
            pl.BlockSpec((Bj, D), lambda: (0, 0)),
        ],
        out_specs=pl.BlockSpec((Bi, Bj), lambda: (0, 0)),
        cost_estimate=cost,
    )(e_i, e_j)


# ----------------------------------- main ------------------------------------ #
if __name__ == "__main__":
    key = jax.random.PRNGKey(0)
    k_img, k_w = jax.random.split(key)

    # Small shapes consistent with the module (NCHW face crops in [0, 255]).
    B, C, H, W = 2, 3, 16, 16
    images = jax.random.uniform(k_img, (B, C, H, W), jnp.float32, 0.0, 255.0)

    d_in = H * W * C
    weight = (jax.random.normal(k_w, (d_in, EMB_DIM), jnp.float32)
              * (1.0 / jnp.sqrt(jnp.float32(d_in))))

    w_bf16, bias = prepare_arcface_params(weight, C, H, W)

    # max_tk=256 -> 3 K-steps and 2 N-steps at these toy shapes, exercising the
    # accumulator init/finalize path.
    emb = arcface_forward(images, w_bf16, bias, max_tk=256)
    emb = jax.block_until_ready(emb)
    assert emb.shape == (B, EMB_DIM) and emb.dtype == jnp.float32

    sims = compute_similarities(emb, emb)
    sims = jax.block_until_ready(sims)
    assert sims.shape == (B, B)

    hi = jax.lax.Precision.HIGHEST

    # (a) tight check against the exact folded/quantized math the kernel runs.
    x_flat = images.reshape(B, d_in).astype(jnp.bfloat16).astype(jnp.float32)
    emb_q_ref = jnp.dot(x_flat, w_bf16.astype(jnp.float32), precision=hi) - bias
    assert jnp.allclose(emb, emb_q_ref, atol=2e-3, rtol=2e-3)

    # (b) looser check against the original f32 module semantics
    #     (NCHW->NHWC transpose + (x-127.5)/127.5 preprocessing + matmul).
    x_nhwc = jnp.transpose(images, (0, 2, 3, 1)).reshape(B, d_in)
    emb_f32_ref = jnp.dot((x_nhwc - 127.5) / 127.5, weight, precision=hi)
    assert jnp.allclose(emb, emb_f32_ref, atol=5e-2, rtol=5e-2)

    # (c) similarity semantics: whole-matrix Frobenius norms, like the module.
    sims_ref = (jnp.dot(emb, emb.T, precision=hi)
                / (jnp.linalg.norm(emb) * jnp.linalg.norm(emb)) * 100.0)
    assert jnp.allclose(sims, sims_ref, atol=5e-2, rtol=1e-2)

    print("KERNEL_OK")
</pallas_src>

<mosaic_0001>
module attributes {stable_mosaic.version = 11 : i64} {
  func.func @_arcface_fwd_kernel(%arg0: i32, %arg1: i32, %arg2: memref<2x256xbf16, #tpu.memory_space<vmem>>, %arg3: memref<256x256xbf16, #tpu.memory_space<vmem>>, %arg4: memref<1x256xf32, #tpu.memory_space<vmem>>, %arg5: memref<2x256xf32, #tpu.memory_space<vmem>>, %arg6: memref<2x256xf32, #tpu.memory_space<vmem>>) attributes {dimension_semantics = [#tpu.dimension_semantics<parallel>, #tpu.dimension_semantics<arbitrary>], iteration_bounds = array<i64: 2, 3>, scalar_prefetch = 0 : i64, scratch_operands = 1 : i64, tpu.core_type = #tpu.core_type<tc>, window_params = [{transform_indices = @transform_0, window_bounds = array<i64: 2, 256>}, {transform_indices = @transform_1, window_bounds = array<i64: 256, 256>}, {transform_indices = @transform_2, window_bounds = array<i64: 1, 256>}, {transform_indices = @transform_3, window_bounds = array<i64: 2, 256>}]} {
    %c0_i32 = arith.constant 0 : i32
    %0 = arith.cmpi eq, %arg1, %c0_i32 : i32
    %1 = arith.extui %0 : i1 to i32
    %c0_i32_0 = arith.constant 0 : i32
    %2 = arith.cmpi ne, %1, %c0_i32_0 : i32
    scf.if %2 {
      %cst_9 = arith.constant 0.000000e+00 : f32
      %12 = vector.broadcast %cst_9 : f32 to vector<2x256xf32>
      %c0_10 = arith.constant 0 : index
      %c0_11 = arith.constant 0 : index
      %13 = vector.load %arg6[%c0_10, %c0_11] : memref<2x256xf32, #tpu.memory_space<vmem>>, vector<2x256xf32>
      tpu.vector_store %arg6[%c0_10, %c0_11], %12 {strides = array<i32>} : memref<2x256xf32, #tpu.memory_space<vmem>>, vector<2x256xf32>,
    } else {
    }
    %c0 = arith.constant 0 : index
    %c0_1 = arith.constant 0 : index
    %3 = vector.load %arg6[%c0, %c0_1] : memref<2x256xf32, #tpu.memory_space<vmem>>, vector<2x256xf32>
    %c0_2 = arith.constant 0 : index
    %c0_3 = arith.constant 0 : index
    %4 = vector.load %arg2[%c0_2, %c0_3] : memref<2x256xbf16, #tpu.memory_space<vmem>>, vector<2x256xbf16>
    %c0_4 = arith.constant 0 : index
    %c0_5 = arith.constant 0 : index
    %5 = vector.load %arg3[%c0_4, %c0_5] : memref<256x256xbf16, #tpu.memory_space<vmem>>, vector<256x256xbf16>
    %cst = arith.constant dense<0.000000e+00> : vector<2x256xf32>
    %6 = tpu.matmul %4, %5, %cst {dimension_numbers = #tpu.dot_dimension_numbers<[1], [0], [0], [1], [0, 0, 1, 1], [], []>} : vector<2x256xbf16>, vector<256x256xbf16>, vector<2x256xf32> -> vector<2x256xf32>
    %7 = arith.addf %3, %6 : vector<2x256xf32>
    %c0_6 = arith.constant 0 : index
    %c0_7 = arith.constant 0 : index
    %8 = vector.load %arg6[%c0_6, %c0_7] : memref<2x256xf32, #tpu.memory_space<vmem>>, vector<2x256xf32>
    tpu.vector_store %arg6[%c0_6, %c0_7], %7 {strides = array<i32>} : memref<2x256xf32, #tpu.memory_space<vmem>>, vector<2x256xf32>,
    %c2_i32 = arith.constant 2 : i32
    %9 = arith.cmpi eq, %arg1, %c2_i32 : i32
    %10 = arith.extui %9 : i1 to i32
    %c0_i32_8 = arith.constant 0 : i32
    %11 = arith.cmpi ne, %10, %c0_i32_8 : i32
    scf.if %11 {
      %c0_9 = arith.constant 0 : index
      %c0_10 = arith.constant 0 : index
      %12 = vector.load %arg6[%c0_9, %c0_10] : memref<2x256xf32, #tpu.memory_space<vmem>>, vector<2x256xf32>
      %c0_11 = arith.constant 0 : index
      %c0_12 = arith.constant 0 : index
      %13 = vector.load %arg4[%c0_11, %c0_12] : memref<1x256xf32, #tpu.memory_space<vmem>>, vector<1x256xf32>
      %14 = vector.broadcast %13 : vector<1x256xf32> to vector<2x256xf32>
      %15 = arith.subf %12, %14 : vector<2x256xf32>
      %c0_13 = arith.constant 0 : index
      %c0_14 = arith.constant 0 : index
      %16 = vector.load %arg5[%c0_13, %c0_14] : memref<2x256xf32, #tpu.memory_space<vmem>>, vector<2x256xf32>
      tpu.vector_store %arg5[%c0_13, %c0_14], %15 {strides = array<i32>} : memref<2x256xf32, #tpu.memory_space<vmem>>, vector<2x256xf32>,
    } else {
    }
    return
  }
  func.func @transform_0(%arg0: i32, %arg1: i32) -> (i32, i32) {
    %c0_i32 = arith.constant 0 : i32
    %c0_i32_0 = arith.constant 0 : i32
    return %c0_i32, %arg1 : i32, i32
  }
  func.func @transform_1(%arg0: i32, %arg1: i32) -> (i32, i32) {
    %c0_i32 = arith.constant 0 : i32
    return %arg1, %arg0 : i32, i32
  }
  func.func @transform_2(%arg0: i32, %arg1: i32) -> (i32, i32) {
    %c0_i32 = arith.constant 0 : i32
    %c0_i32_0 = arith.constant 0 : i32
    return %c0_i32, %arg0 : i32, i32
  }
  func.func @transform_3(%arg0: i32, %arg1: i32) -> (i32, i32) {
    %c0_i32 = arith.constant 0 : i32
    %c0_i32_0 = arith.constant 0 : i32
    return %c0_i32, %arg0 : i32, i32
  }
}

</mosaic_0001>

<llo_original>
// kernel: tpu_custom_call.1
$region0: #{tpu_custom_call.1}
  #allocation0 [shape = 'u32[]', space=smem, size = 0x4, offset = 0x4, fixed_abs, tag = 'smem constant byte address 0x4 - core index']
  #allocation1 [shape = 'u32[144,128]{1,0:T(1,128)}', space=vmem, size = 0x12000, scoped, tag = 'internal scratch']
  #allocation2 [shape = 'f32[2,256]{1,0:T(2,128)}', space=vmem, size = 0x800, scoped, tag = 'scratch operand']
  %s0 = inlined_call_operand.hbm [shape: bf16[2,768], index: 0, kind: input, shape index: {}]
  %s1 = inlined_call_operand.hbm [shape: bf16[768,512], index: 1, kind: input, shape index: {}]
  %s2 = inlined_call_operand.vmem [shape: f32[1,512], index: 2, kind: input, shape index: {}]
  %s3 = inlined_call_operand.hbm [shape: f32[2,512], index: 3, kind: output, shape index: {}]
  %s4 = sld [smem:[#allocation0]]
  $region61: #{tpu_custom_call.1} parent=0
    _
  %s6 = ssub.s32 1, %s4
  %s7 = scalar_select 0, %s6, %s4
  $region1: #{tpu_custom_call.1} parent=0
    #allocation3 [shape = 'u8[2048]{0}', space=vmem, size = 0x800, scoped, tag = 'input window, operand 0']
    #allocation4 [shape = 's32[2]{0}', space=sflag, size = 0x8, scoped, tag = 'scoped memory for tpu_custom_call.1']
    #allocation5 [shape = 's32[2]{0}', space=sflag, size = 0x8, scoped, tag = 'scoped memory for tpu_custom_call.1']
    #allocation6 [shape = 'u8[262144]{0}', space=vmem, size = 0x40000, scoped, tag = 'input window, operand 1']
    #allocation7 [shape = 's32[2]{0}', space=sflag, size = 0x8, scoped, tag = 'scoped memory for tpu_custom_call.1']
    #allocation8 [shape = 'u8[4096]{0}', space=vmem, size = 0x1000, scoped, tag = 'output window, operand 0']
    %8 = vsyncpa [#allocation4], 0
    %s9 = scalar_lea.sflag [#allocation4], 1
    %10 = vsyncpa %s9, 0
    %11 = vsyncpa [#allocation7], 0
    %s12 = scalar_lea.sflag [#allocation7], 1
    %13 = vsyncpa %s12, 0
    %14 = vsyncpa [#allocation5], 0
    %s15 = scalar_lea.sflag [#allocation5], 1
    %16 = vsyncpa %s15, 0
    loop: start=0, step=1, limit=8
    $region2: #{tpu_custom_call.1} parent=1 // loop_pre_header
      _
    $region3: #{tpu_custom_call.1} parent=1 // loop_header
      %s18 = sphi 0, %s22
      %p19 = scmp.ge.s32.totalorder %s18, 8
      %s25 = sphi 0, %s37
      %s26 = sphi 0, %s33
      %s27 = sphi 0, %s25
      %s28 = sphi 0, %s26
      %s29 = sphi 0, %s27
      %s30 = sphi 0, %s28
      %s40 = sphi 0, %s42
      %s43 = sphi 0, %s40
      %s44 = sphi 0, %s43
      %s60 = sphi 0, %s44
      %s68 = sphi 0, %s70
      %s71 = sphi 0, %s68
      %s72 = sphi 0, %s71
      %s88 = sphi 0, %s72
      %s94 = sphi 0, %s96
      %s97 = sphi 0, %s94
      %s98 = sphi 0, %s97
      %s114 = sphi 0, %s98
      %s120 = sphi 0, %s122
      %s123 = sphi 0, %s120
      %s124 = sphi 0, %s123
      %s140 = sphi 0, %s124
    $region4: #{tpu_custom_call.1} parent=1 // loop_header_branch
      %21 = sbr.rel (%p19) target = $region8
    $region5: #{tpu_custom_call.1} parent=1 // loop_body
      %s23 = ssub.s32 %s18, 1
      %s24 = ssub.s32 %s18, 2
      %s31 = sadd.s32 1, %s26
      %p32 = scmp.ge.s32.totalorder %s31, 3
      %s33 = scalar_select %p32, 0, %s31
      %s34 = sadd.s32 1, %s25
      %s35 = scalar_select %p32, %s34, %s25
      %p36 = scmp.ge.s32.totalorder %s35, 2
      %s37 = scalar_select %p36, 0, %s35
      %s38 = ssub.s32 %s26, %s33
      %p39 = scmp.eq.s32.totalorder %s38, 0
      %s41 = sadd.s32 %s40, 1
      %s42 = scalar_select %p39, %s40, %s41
      %p45 = pneg %p39
      %p46 = scmp.eq.s32.totalorder %s18, 5
      %p47 = por %p45, %p46
      %p48 = scmp.ne.s32.totalorder %s40, %s43
      %p49 = scmp.eq.s32.totalorder %s18, 0
      %p50 = por %p48, %p49
      %p51 = scmp.ne.s32.totalorder %s40, %s43
      %p52 = scmp.eq.s32.totalorder %s23, 5
      %p53 = por %p51, %p52
      %p54 = scmp.ne.s32.totalorder %s43, %s44
      %p55 = scmp.eq.s32.totalorder %s23, 0
      %p56 = por %p54, %p55
      %p57 = scmp.ne.s32.totalorder %s43, %s44
      %p58 = scmp.eq.s32.totalorder %s24, 5
      %p59 = por %p57, %p58
      %p61 = scmp.ne.s32.totalorder %s44, %s60
      %p62 = scmp.eq.s32.totalorder %s24, 0
      %p63 = por %p61, %p62
      %s64 = ssub.s32 %s26, %s33
      %s65 = ssub.s32 %s25, %s37
      %s66 = sor.u32 %s64, %s65
      %p67 = scmp.eq.s32.totalorder %s66, 0
      %s69 = sadd.s32 %s68, 1
      %s70 = scalar_select %p67, %s68, %s69
      %p73 = pneg %p67
      %p74 = scmp.eq.s32.totalorder %s18, 5
      %p75 = por %p73, %p74
      %p76 = scmp.ne.s32.totalorder %s68, %s71
      %p77 = scmp.eq.s32.totalorder %s18, 0
      %p78 = por %p76, %p77
      %p79 = scmp.ne.s32.totalorder %s68, %s71
      %p80 = scmp.eq.s32.totalorder %s23, 5
      %p81 = por %p79, %p80
      %p82 = scmp.ne.s32.totalorder %s71, %s72
      %p83 = scmp.eq.s32.totalorder %s23, 0
      %p84 = por %p82, %p83
      %p85 = scmp.ne.s32.totalorder %s71, %s72
      %p86 = scmp.eq.s32.totalorder %s24, 5
      %p87 = por %p85, %p86
      %p89 = scmp.ne.s32.totalorder %s72, %s88
      %p90 = scmp.eq.s32.totalorder %s24, 0
      %p91 = por %p89, %p90
      %s92 = ssub.s32 %s25, %s37
      %p93 = scmp.eq.s32.totalorder %s92, 0
      %s95 = sadd.s32 %s94, 1
      %s96 = scalar_select %p93, %s94, %s95
      %p99 = pneg %p93
      %p100 = scmp.eq.s32.totalorder %s18, 5
      %p101 = por %p99, %p100
      %p102 = scmp.ne.s32.totalorder %s94, %s97
      %p103 = scmp.eq.s32.totalorder %s18, 0
      %p104 = por %p102, %p103
      %p105 = scmp.ne.s32.totalorder %s94, %s97
      %p106 = scmp.eq.s32.totalorder %s23, 5
      %p107 = por %p105, %p106
      %p108 = scmp.ne.s32.totalorder %s97, %s98
      %p109 = scmp.eq.s32.totalorder %s23, 0
      %p110 = por %p108, %p109
      %p111 = scmp.ne.s32.totalorder %s97, %s98
      %p112 = scmp.eq.s32.totalorder %s24, 5
      %p113 = por %p111, %p112
      %p115 = scmp.ne.s32.totalorder %s98, %s114
      %p116 = scmp.eq.s32.totalorder %s24, 0
      %p117 = por %p115, %p116
      %s118 = ssub.s32 %s25, %s37
      %p119 = scmp.eq.s32.totalorder %s118, 0
      %s121 = sadd.s32 %s120, 1
      %s122 = scalar_select %p119, %s120, %s121
      %p125 = pneg %p119
      %p126 = scmp.eq.s32.totalorder %s18, 5
      %p127 = por %p125, %p126
      %p128 = scmp.ne.s32.totalorder %s120, %s123
      %p129 = scmp.eq.s32.totalorder %s18, 0
      %p130 = por %p128, %p129
      %p131 = scmp.ne.s32.totalorder %s120, %s123
      %p132 = scmp.eq.s32.totalorder %s23, 5
      %p133 = por %p131, %p132
      %p134 = scmp.ne.s32.totalorder %s123, %s124
      %p135 = scmp.eq.s32.totalorder %s23, 0
      %p136 = por %p134, %p135
      %p137 = scmp.ne.s32.totalorder %s123, %s124
      %p138 = scmp.eq.s32.totalorder %s24, 5
      %p139 = por %p137, %p138
      %p141 = scmp.ne.s32.totalorder %s124, %s140
      %p142 = scmp.eq.s32.totalorder %s24, 0
      %p143 = por %p141, %p142
      %p144 = scmp.le.s32.totalorder 1, %s18
      %p145 = scmp.lt.s32.totalorder %s18, 7
      %p146 = pnand %p144, %p145
      %p147 = pneg %p146
      // Predicated region
      $region9: #{tpu_custom_call.1} parent=5 // pred_check
        _
      $region10: #{tpu_custom_call.1} parent=5 // pred_check_branch
        %149 = sbr.rel (%p146) target = $region12
      $region11: #{tpu_custom_call.1} parent=5 // pred_region
        %s150 = ssub.s32 %s18, 1
      $region12: #{tpu_custom_call.1} parent=5 // pred_fallthru
        _
      %p151 = scmp.lt.s32.totalorder %s18, 6
      // Predicated region
      $region13: #{tpu_custom_call.1} parent=5 // pred_check
        %p152 = pneg %p151
      $region14: #{tpu_custom_call.1} parent=5 // pred_check_branch
        %154 = sbr.rel (%p152) target = $region16
      $region15: #{tpu_custom_call.1} parent=5 // pred_region
        // Predicated region
        $region17: #{tpu_custom_call.1} parent=15 // pred_check
          %p155 = pneg %p50
        $region18: #{tpu_custom_call.1} parent=15 // pred_check_branch
          %157 = sbr.rel (%p155) target = $region20
        $region19: #{tpu_custom_call.1} parent=15 // pred_region
          %s158 = sand.u32 %s40, 1
          %s159 = scalar_lea.sflag [#allocation4], %s158
          %s160 = sand.u32 %s40, 1
          %s161 = smul.addr %s160, 2
          %s162 = scalar_lea.vmem [#allocation3], %s161
          %s163 = smul.u32 2, %s26
          %s165 = ssub.s32 32, 32
          %166 = vsyncadd %s159, %s165
          %s167 = smul.addr %s163, 16
          %s168 = scalar_lea.hbm %s0, %s167
          %s170 = sshll.u32 %s162, 4
          %s171 = int_to_ptr.vmem [resolvable:$true] %s170
          %173 = dma.hbm_to_vmem [thread:$0]  %s168, 32, %s171, %s159
        $region20: #{tpu_custom_call.1} parent=15 // pred_fallthru
          _
        // Predicated region
        $region21: #{tpu_custom_call.1} parent=15 // pred_check
          %p174 = pneg %p78
        $region22: #{tpu_custom_call.1} parent=15 // pred_check_branch
          %176 = sbr.rel (%p174) target = $region24
        $region23: #{tpu_custom_call.1} parent=15 // pred_region
          %s177 = sand.u32 %s68, 1
          %s178 = scalar_lea.sflag [#allocation7], %s177
          %s179 = sand.u32 %s68, 1
          %s180 = smul.addr %s179, 256
          %s181 = scalar_lea.vmem [#allocation6], %s180
          %s182 = smul.u32 32, %s26
          %s183 = smul.u32 2, %s25
          %s185 = ssub.s32 4096, 4096
          %186 = vsyncadd %s178, %s185
          %s187 = smul.addr %s182, 4
          %s188 = sadd.s32 %s183, %s187
          %s189 = smul.addr %s188, 64
          %s190 = scalar_lea.hbm %s1, %s189
          %s191 = sshll.u32 %s181, 4
          %s192 = int_to_ptr.vmem [resolvable:$true] %s191
          %197 = dma.hbm_to_vmem [thread:$0]  %s190, 4096, %s192, %s178, 256, 128, 8
        $region24: #{tpu_custom_call.1} parent=15 // pred_fallthru
          _
        // Predicated region
        $region25: #{tpu_custom_call.1} parent=15 // pred_check
          %p198 = pneg %p104
        $region26: #{tpu_custom_call.1} parent=15 // pred_check_branch
          %200 = sbr.rel (%p198) target = $region28
        $region27: #{tpu_custom_call.1} parent=15 // pred_region
          %s201 = smul.u32 2, %s25
          %p202 = scmp.lt.s32.totalorder %s201, 3
          %s203 = scalar_select %p202, %s201, 3
          %s204 = scalar_lea.vmem %s2, %s203
          %s205 = smul.u32 2, %s25
        $region28: #{tpu_custom_call.1} parent=15 // pred_fallthru
          _
      $region16: #{tpu_custom_call.1} parent=5 // pred_fallthru
        _
      %p206 = scmp.le.s32.totalorder 1, %s18
      %p207 = scmp.lt.s32.totalorder %s18, 7
      %p208 = pnand %p206, %p207
      %p209 = pneg %p208
      // Predicated region
      $region29: #{tpu_custom_call.1} parent=5 // pred_check
        _
      $region30: #{tpu_custom_call.1} parent=5 // pred_check_branch
        %211 = sbr.rel (%p208) target = $region32
      $region31: #{tpu_custom_call.1} parent=5 // pred_region
        %s212 = ssub.s32 %s18, 1
        %s213 = sand.u32 %s43, 1
        %s214 = scalar_lea.sflag [#allocation4], %s213
        %s215 = sand.u32 %s43, 1
        %s216 = smul.addr %s215, 2
        %s217 = scalar_lea.vmem [#allocation3], %s216
        // Predicated region
        $region33: #{tpu_custom_call.1} parent=31 // pred_check
          %p218 = pneg %p56
        $region34: #{tpu_custom_call.1} parent=31 // pred_check_branch
          %220 = sbr.rel (%p218) target = $region36
        $region35: #{tpu_custom_call.1} parent=31 // pred_region
          %221 = dma.done %s214, 32
        $region36: #{tpu_custom_call.1} parent=31 // pred_fallthru
          _
        %s222 = sand.u32 %s71, 1
        %s223 = scalar_lea.sflag [#allocation7], %s222
        %s224 = sand.u32 %s71, 1
        %s225 = smul.addr %s224, 256
        %s226 = scalar_lea.vmem [#allocation6], %s225
        // Predicated region
        $region37: #{tpu_custom_call.1} parent=31 // pred_check
          %p227 = pneg %p84
        $region38: #{tpu_custom_call.1} parent=31 // pred_check_branch
          %229 = sbr.rel (%p227) target = $region40
        $region39: #{tpu_custom_call.1} parent=31 // pred_region
          %230 = dma.done %s223, 4096
        $region40: #{tpu_custom_call.1} parent=31 // pred_fallthru
          _
        %s231 = sand.u32 %s43, 1
        %s232 = scalar_lea.sflag [#allocation4], %s231
        %s233 = sand.u32 %s43, 1
        %s234 = smul.addr %s233, 2
        %s235 = scalar_lea.vmem [#allocation3], %s234
        %p236 = pneg %p56
        %p237 = pneg %p53
        %s238 = sand.u32 %s71, 1
        %s239 = scalar_lea.sflag [#allocation7], %s238
        %s240 = sand.u32 %s71, 1
        %s241 = smul.addr %s240, 256
        %s242 = scalar_lea.vmem [#allocation6], %s241
        %p243 = pneg %p84
        %p244 = pneg %p81
        %s245 = smul.u32 2, %s27
        %p246 = scmp.lt.s32.totalorder %s245, 3
        %s247 = scalar_select %p246, %s245, 3
        %s248 = scalar_lea.vmem %s2, %s247
        %p249 = pneg %p110
        %p250 = pneg %p107
        %p251 = pneg %p136
        %p252 = pneg %p133
        %s253 = sand.u32 %s123, 1
        %s254 = scalar_lea.sflag [#allocation5], %s253
        %s255 = sand.u32 %s123, 1
        %s256 = smul.addr %s255, 4
        %s257 = scalar_lea.vmem [#allocation8], %s256
        %s258 = smul.u32 2, %s28
        %s259 = smul.u32 32, %s28
        %s260 = smul.u32 2, %s27
        %s261 = smul.u32 2, %s27
        %p262 = scmp.lt.s32.totalorder %s261, 3
        %s263 = scalar_select %p262, %s261, 3
        %s264 = scalar_lea.vmem %s2, %s263
        %s265 = smul.u32 2, %s27
        %s266 = smul.u32 2, %s27
        %p267 = scmp.eq.s32.totalorder %s28, 0
        // Predicated region
        $region41: #{tpu_custom_call.1} parent=31 // pred_check
          %p268 = pneg %p267
        $region42: #{tpu_custom_call.1} parent=31 // pred_check_branch
          %270 = sbr.rel (%p268) target = $region44
        $region43: #{tpu_custom_call.1} parent=31 // pred_region
          %271 = vst [vmem:[#allocation2] sm:$0xf] 0.0
        $region44: #{tpu_custom_call.1} parent=31 // pred_fallthru
          _
        %v272 = vld [vmem:[#allocation2] sm:$0xf]
        %v273 = vld [vmem:[%s217] sm:$0x3]
        %v274 = vld [vmem:[%s226] sm:$0xff]
        %v275 = vld [vmem:[%s226 + $0x8] sm:$0xff]
        %v276 = vld [vmem:[%s226 + $0x10] sm:$0xff]
        %v277 = vld [vmem:[%s226 + $0x18] sm:$0xff]
        %v278 = vld [vmem:[%s226 + $0x20] sm:$0xff]
        %v279 = vld [vmem:[%s226 + $0x28] sm:$0xff]
        %v280 = vld [vmem:[%s226 + $0x30] sm:$0xff]
        %v281 = vld [vmem:[%s226 + $0x38] sm:$0xff]
        %v282 = vld [vmem:[%s226 + $0x40] sm:$0xff]
        %v283 = vld [vmem:[%s226 + $0x48] sm:$0xff]
        %v284 = vld [vmem:[%s226 + $0x50] sm:$0xff]
        %v285 = vld [vmem:[%s226 + $0x58] sm:$0xff]
        %v286 = vld [vmem:[%s226 + $0x60] sm:$0xff]
        %v287 = vld [vmem:[%s226 + $0x68] sm:$0xff]
        %v288 = vld [vmem:[%s226 + $0x70] sm:$0xff]
        %v289 = vld [vmem:[%s226 + $0x78] sm:$0xff]
        %v290 = vld [vmem:[%s226 + $0x80] sm:$0xff]
        %v291 = vld [vmem:[%s226 + $0x88] sm:$0xff]
        %v292 = vld [vmem:[%s226 + $0x90] sm:$0xff]
        %v293 = vld [vmem:[%s226 + $0x98] sm:$0xff]
        %v294 = vld [vmem:[%s226 + $0xa0] sm:$0xff]
        %v295 = vld [vmem:[%s226 + $0xa8] sm:$0xff]
        %v296 = vld [vmem:[%s226 + $0xb0] sm:$0xff]
        %v297 = vld [vmem:[%s226 + $0xb8] sm:$0xff]
        %v298 = vld [vmem:[%s226 + $0xc0] sm:$0xff]
        %v299 = vld [vmem:[%s226 + $0xc8] sm:$0xff]
        %v300 = vld [vmem:[%s226 + $0xd0] sm:$0xff]
        %v301 = vld [vmem:[%s226 + $0xd8] sm:$0xff]
        %v302 = vld [vmem:[%s226 + $0xe0] sm:$0xff]
        %v303 = vld [vmem:[%s226 + $0xe8] sm:$0xff]
        %v304 = vld [vmem:[%s226 + $0xf0] sm:$0xff]
        %v305 = vld [vmem:[%s226 + $0xf8] sm:$0xff]
        %v308 = vunpack.c.l.s4 1966171168
        %v309 = vunpack.c.0.s8 %v308
        %v310 = vlaneseq
        %v311 = vshrl.u32 %v310, 7
        %v312 = vsub.s32 %v309, %v311
        %v313 = vrot.slane %v273, %v312
        %v314 = vcombine.high %v313, %v313
        %v316 = vunpack.c.l.s4 1966171168
        %v317 = vunpack.c.0.s8 %v316
        %v318 = vlaneseq
        %v319 = vshrl.u32 %v318, 7
        %v320 = vsub.s32 %v317, %v319
        %v321 = vrot.slane %v313, %v320
        %v323 = vunpack.c.l.s4 1966171168
        %v324 = vunpack.c.0.s8 %v323
        %v325 = vlaneseq
        %v326 = vshrl.u32 %v325, 7
        %v327 = vsub.s32 %v324, %v326
        %v328 = vrot.slane %v314, %v327
        %v363 = vunpack.c.l.b16 %v274
        %v364 = vunpack.c.h.b16 %v274
        %v365 = vunpack.c.l.b16 %v275
        %v366 = vunpack.c.h.b16 %v275
        %v367 = vunpack.c.l.b16 %v276
        %v368 = vunpack.c.h.b16 %v276
        %v369 = vunpack.c.l.b16 %v277
        %v370 = vunpack.c.h.b16 %v277
        %v371 = vunpack.c.l.b16 %v278
        %v372 = vunpack.c.h.b16 %v278
        %v373 = vunpack.c.l.b16 %v279
        %v374 = vunpack.c.h.b16 %v279
        %v375 = vunpack.c.l.b16 %v280
        %v376 = vunpack.c.h.b16 %v280
        %v377 = vunpack.c.l.b16 %v281
        %v378 = vunpack.c.h.b16 %v281
        %v379 = vunpack.c.l.b16 %v282
        %v380 = vunpack.c.h.b16 %v282
        %v381 = vunpack.c.l.b16 %v283
        %v382 = vunpack.c.h.b16 %v283
        %v383 = vunpack.c.l.b16 %v284
        %v384 = vunpack.c.h.b16 %v284
        %v385 = vunpack.c.l.b16 %v285
        %v386 = vunpack.c.h.b16 %v285
        %v387 = vunpack.c.l.b16 %v286
        %v388 = vunpack.c.h.b16 %v286
        %v389 = vunpack.c.l.b16 %v287
        %v390 = vunpack.c.h.b16 %v287
        %v391 = vunpack.c.l.b16 %v288
        %v392 = vunpack.c.h.b16 %v288
        %v393 = vunpack.c.l.b16 %v289
        %v394 = vunpack.c.h.b16 %v289
        %v395 = vunpack.c.l.b16 %v290
        %v396 = vunpack.c.h.b16 %v290
        %v397 = vunpack.c.l.b16 %v291
        %v398 = vunpack.c.h.b16 %v291
        %v399 = vunpack.c.l.b16 %v292
        %v400 = vunpack.c.h.b16 %v292
        %v401 = vunpack.c.l.b16 %v293
        %v402 = vunpack.c.h.b16 %v293
        %v403 = vunpack.c.l.b16 %v294
        %v404 = vunpack.c.h.b16 %v294
        %v405 = vunpack.c.l.b16 %v295
        %v406 = vunpack.c.h.b16 %v295
        %v407 = vunpack.c.l.b16 %v296
        %v408 = vunpack.c.h.b16 %v296
        %v409 = vunpack.c.l.b16 %v297
        %v410 = vunpack.c.h.b16 %v297
        %v411 = vunpack.c.l.b16 %v298
        %v412 = vunpack.c.h.b16 %v298
        %v413 = vunpack.c.l.b16 %v299
        %v414 = vunpack.c.h.b16 %v299
        %v415 = vunpack.c.l.b16 %v300
        %v416 = vunpack.c.h.b16 %v300
        %v417 = vunpack.c.l.b16 %v301
        %v418 = vunpack.c.h.b16 %v301
        %v419 = vunpack.c.l.b16 %v302
        %v420 = vunpack.c.h.b16 %v302
        %v421 = vunpack.c.l.b16 %v303
        %v422 = vunpack.c.h.b16 %v303
        %v423 = vunpack.c.l.b16 %v304
        %v424 = vunpack.c.h.b16 %v304
        %v425 = vunpack.c.l.b16 %v305
        %v426 = vunpack.c.h.b16 %v305
        %v427 = vpack.c.b16 %v365, %v363
        %v428 = vpack.c.b16 %v366, %v364
        %v429 = vpack.c.b16 %v369, %v367
        %v430 = vpack.c.b16 %v370, %v368
        %v431 = vpack.c.b16 %v373, %v371
        %v432 = vpack.c.b16 %v374, %v372
        %v433 = vpack.c.b16 %v377, %v375
        %v434 = vpack.c.b16 %v378, %v376
        %v435 = vpack.c.b16 %v381, %v379
        %v436 = vpack.c.b16 %v382, %v380
        %v437 = vpack.c.b16 %v385, %v383
        %v438 = vpack.c.b16 %v386, %v384
        %v439 = vpack.c.b16 %v389, %v387
        %v440 = vpack.c.b16 %v390, %v388
        %v441 = vpack.c.b16 %v393, %v391
        %v442 = vpack.c.b16 %v394, %v392
        %v443 = vpack.c.b16 %v397, %v395
        %v444 = vpack.c.b16 %v398, %v396
        %v445 = vpack.c.b16 %v401, %v399
        %v446 = vpack.c.b16 %v402, %v400
        %v447 = vpack.c.b16 %v405, %v403
        %v448 = vpack.c.b16 %v406, %v404
        %v449 = vpack.c.b16 %v409, %v407
        %v450 = vpack.c.b16 %v410, %v408
        %v451 = vpack.c.b16 %v413, %v411
        %v452 = vpack.c.b16 %v414, %v412
        %v453 = vpack.c.b16 %v417, %v415
        %v454 = vpack.c.b16 %v418, %v416
        %v455 = vpack.c.b16 %v421, %v419
        %v456 = vpack.c.b16 %v422, %v420
        %v457 = vpack.c.b16 %v425, %v423
        %v458 = vpack.c.b16 %v426, %v424
        %491 = vmatprep.subr.bf16.mxu0 %v428
        %492 = vmatpush1.bf16.msra.mxu0 %v427
        %493 = vmatprep.subr.bf16.mxu0 %v430
        %494 = vmatpush1.bf16.msra.mxu0 %v429
        %495 = vmatprep.subr.bf16.mxu0 %v432
        %496 = vmatpush1.bf16.msra.mxu0 %v431
        %497 = vmatprep.subr.bf16.mxu0 %v434
        %498 = vmatpush1.bf16.msra.mxu0 %v433
        %499 = vmatprep.subr.bf16.mxu0 %v436
        %500 = vmatpush1.bf16.msra.mxu0 %v435
        %501 = vmatprep.subr.bf16.mxu0 %v438
        %502 = vmatpush1.bf16.msra.mxu0 %v437
        %503 = vmatprep.subr.bf16.mxu0 %v440
        %504 = vmatpush1.bf16.msra.mxu0 %v439
        %505 = vmatprep.subr.bf16.mxu0 %v442
        %506 = vmatpush1.bf16.msra.mxu0 %v441
        %507 = vmatprep.subr.bf16.mxu0 %v444
        %508 = vmatpush1.bf16.msra.mxu0 %v443
        %509 = vmatprep.subr.bf16.mxu0 %v446
        %510 = vmatpush1.bf16.msra.mxu0 %v445
        %511 = vmatprep.subr.bf16.mxu0 %v448
        %512 = vmatpush1.bf16.msra.mxu0 %v447
        %513 = vmatprep.subr.bf16.mxu0 %v450
        %514 = vmatpush1.bf16.msra.mxu0 %v449
        %515 = vmatprep.subr.bf16.mxu0 %v452
        %516 = vmatpush1.bf16.msra.mxu0 %v451
        %517 = vmatprep.subr.bf16.mxu0 %v454
        %518 = vmatpush1.bf16.msra.mxu0 %v453
        %519 = vmatprep.subr.bf16.mxu0 %v456
        %520 = vmatpush1.bf16.msra.mxu0 %v455
        %521 = vmatprep.subr.bf16.mxu0 %v458
        %522 = vmatpush1.bf16.msra.mxu0 %v457
        %523 = vmatprep.mubr.bf16.mxu0 %v328
        %524 = vmatmul.mubr.bf16.gmra.mrb[0].mxu0 %v321
        %v525 = vpop.f32.mrb[0].mxu0
        %v526 = vadd.f32 0.0, %v525
        %v527 = vpop.f32.mrb[0].mxu0
        %v528 = vadd.f32 0.0, %v527
        %v529 = vpop.f32.mrb[0].mxu0
        %v530 = vpop.f32.mrb[0].mxu0
        %531 = vdwg.mxu0
        %v534 = vcombine.low %v526, %v528
        %v536 = vunpack.c.l.s4 1983009808
        %v537 = vunpack.c.0.s8 %v536
        %v538 = vlaneseq
        %v539 = vshrl.u32 %v538, 7
        %v540 = vsub.s32 %v537, %v539
        %v541 = vrot.slane %v534, %v540
        %v543 = vadd.f32 %v272, %v541
        %544 = vst [vmem:[#allocation2] sm:$0xf] %v543
        %p545 = scmp.eq.s32.totalorder %s28, 2
        // Predicated region
        $region45: #{tpu_custom_call.1} parent=31 // pred_check
          %p546 = pneg %p545
        $region46: #{tpu_custom_call.1} parent=31 // pred_check_branch
          %548 = sbr.rel (%p546) target = $region48
        $region47: #{tpu_custom_call.1} parent=31 // pred_region
          %v549 = vld [vmem:[#allocation2] sm:$0xf]
          %v550 = vld [vmem:[%s264] sm:$0x3]
          %v552 = vlaneseq
          %v553 = vshrl.u32 %v552, 7
          %v554 = vsub.s32 0, %v553
          %v555 = vrot.slane %v550, %v554
          %v556 = vlaneseq
          %v557 = vshrl.u32 %v556, 7
          %v558 = vsub.s32 1, %v557
          %v559 = vrot.slane %v550, %v558
          %v560 = vcombine.low %v555, %v559
          %v562 = vunpack.c.l.s4 1983009808
          %v563 = vunpack.c.0.s8 %v562
          %v564 = vlaneseq
          %v565 = vshrl.u32 %v564, 7
          %v566 = vsub.s32 %v563, %v565
          %v567 = vrot.slane %v560, %v566
          %v569 = vsub.f32 %v549, %v567
          %570 = vst [vmem:[%s257] sm:$0xf] %v569
        $region48: #{tpu_custom_call.1} parent=31 // pred_fallthru
          _
        %s571 = sand.u32 %s123, 1
        %s572 = scalar_lea.sflag [#allocation5], %s571
        %s573 = sand.u32 %s123, 1
        %s574 = smul.addr %s573, 4
        %s575 = scalar_lea.vmem [#allocation8], %s574
        // Predicated region
        $region49: #{tpu_custom_call.1} parent=31 // pred_check
          %p576 = pneg %p133
        $region50: #{tpu_custom_call.1} parent=31 // pred_check_branch
          %578 = sbr.rel (%p576) target = $region52
        $region51: #{tpu_custom_call.1} parent=31 // pred_region
          %s579 = smul.u32 2, %s27
          %s581 = ssub.s32 64, 64
          %582 = vsyncadd %s572, %s581
          %s583 = smul.addr %s579, 32
          %s584 = scalar_lea.hbm %s3, %s583
          %s586 = sshll.u32 %s575, 4
          %s587 = int_to_ptr.vmem [resolvable:$true] %s586
          %589 = dma.vmem_to_hbm [thread:$0]  %s587, 64, %s584, %s572
        $region52: #{tpu_custom_call.1} parent=31 // pred_fallthru
          _
      $region32: #{tpu_custom_call.1} parent=5 // pred_fallthru
        _
      %p590 = scmp.le.s32.totalorder 2, %s18
      // Predicated region
      $region53: #{tpu_custom_call.1} parent=5 // pred_check
        %p591 = pneg %p590
      $region54: #{tpu_custom_call.1} parent=5 // pred_check_branch
        %593 = sbr.rel (%p591) target = $region56
      $region55: #{tpu_custom_call.1} parent=5 // pred_region
        %s594 = ssub.s32 %s18, 2
        // Predicated region
        $region57: #{tpu_custom_call.1} parent=55 // pred_check
          %p595 = pneg %p139
        $region58: #{tpu_custom_call.1} parent=55 // pred_check_branch
          %597 = sbr.rel (%p595) target = $region60
        $region59: #{tpu_custom_call.1} parent=55 // pred_region
          %s598 = sand.u32 %s124, 1
          %s599 = scalar_lea.sflag [#allocation5], %s598
          %s600 = sand.u32 %s124, 1
          %s601 = smul.addr %s600, 4
          %s602 = scalar_lea.vmem [#allocation8], %s601
          %603 = dma.done %s599, 64
        $region60: #{tpu_custom_call.1} parent=55 // pred_fallthru
          _
      $region56: #{tpu_custom_call.1} parent=5 // pred_fallthru
        _
    $region6: #{tpu_custom_call.1} parent=1 // loop_footer
      %s22 = sadd.s32 1, %s18
    $region7: #{tpu_custom_call.1} parent=1 // loop_footer_branch
      %17 = sbr.rel target = $region3
    $region8: #{tpu_custom_call.1} parent=1 // loop_exit
      _
    %604 = vsyncpa [#allocation4], 1
    %s605 = scalar_lea.sflag [#allocation4], 1
    %606 = vsyncpa %s605, 1
    %607 = vsyncpa [#allocation7], 1
    %s608 = scalar_lea.sflag [#allocation7], 1
    %609 = vsyncpa %s608, 1
    %610 = vsyncpa [#allocation5], 1
    %s611 = scalar_lea.sflag [#allocation5], 1
    %612 = vsyncpa %s611, 1

</llo_original>
